<compile_context>
chip_gen: v7x
topology: tpu7x:2x2x1
jax: 0.10.0
libtpu: 0.0.40
codegen_flags: <defaults>
</compile_context>

<pallas_src>
import functools

import jax
import jax.numpy as jnp
from jax.experimental import pallas as pl
from jax.experimental.pallas import tpu as pltpu


def _round_up(x, m):
    return ((x + m - 1) // m) * m


# ---------------------------------------------------------------------------
# Kernel A: K fits in a single block.  One MXU pass, fused bias / requantize,
# no scratch accumulator.
#   patches block: (tm, K)   bf16
#   weight  block: (K,  Cp)  bf16   (Cp = Cout padded to a multiple of 128)
#   bias    block: (1,  Cp)  f32
#   out     block: (tm, Cp)  bf16   (requantized quint8 values, 0..255)
# ---------------------------------------------------------------------------
def _conv_kernel_single_k(p_ref, w_ref, b_ref, out_ref):
    acc = jnp.dot(p_ref[...], w_ref[...], preferred_element_type=jnp.float32)
    acc = acc + b_ref[...]  # (1, Cp) broadcast over tm rows
    # quantized.conv2d requantize with scale=1.0, zero_point=0 -> quint8:
    # round-half-to-even then clamp to [0, 255].  Values are exact in bf16.
    out_ref[...] = jnp.clip(jnp.round(acc), 0.0, 255.0).astype(out_ref.dtype)


# ---------------------------------------------------------------------------
# Kernel B: large K -> K-reduction grid axis (last, "arbitrary") with an f32
# VMEM accumulator and pl.when init / finalize.
# ---------------------------------------------------------------------------
def _conv_kernel_split_k(p_ref, w_ref, b_ref, out_ref, acc_ref):
    k = pl.program_id(1)

    @pl.when(k == 0)
    def _():
        acc_ref[...] = jnp.zeros_like(acc_ref)

    acc_ref[...] += jnp.dot(
        p_ref[...], w_ref[...], preferred_element_type=jnp.float32
    )

    @pl.when(k == pl.num_programs(1) - 1)
    def _():
        acc = acc_ref[...] + b_ref[...]
        out_ref[...] = jnp.clip(jnp.round(acc), 0.0, 255.0).astype(out_ref.dtype)


def _conv_matmul(patches, w2d, bias, *, tm_max=512):
    """patches: (M, K) bf16, w2d: (K, Cout) bf16, bias: (Cout,) f32 -> (M, Cout) bf16."""
    M, K = patches.shape
    Cout = w2d.shape[1]
    Cp = _round_up(Cout, 128)

    # K tiling: keep the full (unpadded) K as one block whenever it fits; the
    # block dim then equals the array dim, which satisfies the (8,128) rule.
    single_k = K <= 2048
    if single_k:
        Kp, tk = K, K
    else:
        Kp = _round_up(K, 128)
        tk = next(c for c in (512, 256, 128) if Kp % c == 0)

    # Row tile: biggest that fits a conservative VMEM budget (double-buffered
    # inputs + outputs + f32 accumulator must stay well under the 32 MiB
    # scoped limit, which is safe on v5e / v6e / v7x).
    tm = min(tm_max, _round_up(M, 16))          # bf16 sublane tiling

    def _vmem_bytes(tm_):
        return (2 * (tm_ * tk + tk * Cp) * 2    # double-buffered bf16 inputs
                + 2 * tm_ * Cp * 2              # double-buffered bf16 output
                + tm_ * Cp * 4                  # f32 accumulator (split-K path)
                + 2 * Cp * 4)                   # bias

    while tm > 128 and _vmem_bytes(tm) > 20 * 1024 * 1024:
        tm //= 2
    Mp = _round_up(M, tm)

    # Zero padding (zeros contribute nothing to the dot; padded rows / cols
    # are sliced off below).  Skip the pad ops entirely when nothing changes.
    if (Mp, Kp) != (M, K):
        patches = jnp.pad(patches, ((0, Mp - M), (0, Kp - K)))
    if (Kp, Cp) != (K, Cout):
        w2d = jnp.pad(w2d, ((0, Kp - K), (0, Cp - Cout)))
    b2d = bias.astype(jnp.float32).reshape(1, Cout)
    if Cp != Cout:
        b2d = jnp.pad(b2d, ((0, 0), (0, Cp - Cout)))

    if single_k:
        out = pl.pallas_call(
            _conv_kernel_single_k,
            out_shape=jax.ShapeDtypeStruct((Mp, Cp), jnp.bfloat16),
            grid_spec=pltpu.PrefetchScalarGridSpec(
                num_scalar_prefetch=0,
                grid=(Mp // tm,),
                in_specs=[
                    pl.BlockSpec((tm, Kp), lambda i: (i, 0)),
                    pl.BlockSpec((Kp, Cp), lambda i: (0, 0)),
                    pl.BlockSpec((1, Cp), lambda i: (0, 0)),
                ],
                out_specs=pl.BlockSpec((tm, Cp), lambda i: (i, 0)),
            ),
            compiler_params=pltpu.CompilerParams(
                dimension_semantics=("parallel",),
                vmem_limit_bytes=32 * 1024 * 1024,
            ),
        )(patches, w2d, b2d)
    else:
        out = pl.pallas_call(
            _conv_kernel_split_k,
            out_shape=jax.ShapeDtypeStruct((Mp, Cp), jnp.bfloat16),
            grid_spec=pltpu.PrefetchScalarGridSpec(
                num_scalar_prefetch=0,
                grid=(Mp // tm, Kp // tk),
                in_specs=[
                    pl.BlockSpec((tm, tk), lambda i, k: (i, k)),
                    pl.BlockSpec((tk, Cp), lambda i, k: (k, 0)),
                    pl.BlockSpec((1, Cp), lambda i, k: (0, 0)),
                ],
                out_specs=pl.BlockSpec((tm, Cp), lambda i, k: (i, 0)),
                scratch_shapes=[pltpu.VMEM((tm, Cp), jnp.float32)],
            ),
            compiler_params=pltpu.CompilerParams(
                dimension_semantics=("parallel", "arbitrary"),
                vmem_limit_bytes=32 * 1024 * 1024,
            ),
        )(patches, w2d, b2d)

    return out[:M, :Cout]


# ---------------------------------------------------------------------------
# Module wrapper: quantized Conv2d forward (groups=1, zero padding only)
# ---------------------------------------------------------------------------
@functools.partial(jax.jit, static_argnames=("stride", "padding", "dilation"))
def quantized_conv2d(x, weight, bias, *, stride=(1, 1), padding=(0, 0), dilation=(1, 1)):
    if x.ndim != 4:
        raise ValueError("Input shape must be `(N, C, H, W)`!")
    # TODO(synk): groups > 1 not implemented (module default is groups=1).
    N, Cin, H, W = x.shape
    Cout, _, KH, KW = weight.shape
    sh, sw = stride
    ph, pw = padding
    dh, dw = dilation
    Hout = (H + 2 * ph - dh * (KH - 1) - 1) // sh + 1
    Wout = (W + 2 * pw - dw * (KW - 1) - 1) // sw + 1

    # 8-bit-valued data carried in bf16: exact for quint8/qint8 values, halves
    # HBM traffic vs f32 and hits the MXU bf16 path on v5e / v6e / v7x.
    # TODO(synk): int8/uint8 carriers with int32 MXU accumulation on v5e/v6e.
    xb = x.astype(jnp.bfloat16).transpose(0, 2, 3, 1)            # NHWC
    xp = jnp.pad(xb, ((0, 0), (ph, ph), (pw, pw), (0, 0)))

    # im2col directly in GEMM layout: concat of strided slices -> no big
    # transpose of the (M, K) patches array.  K ordering is (kh, kw, cin).
    # TODO(synk): fold patch extraction into the kernel as an implicit GEMM to
    # avoid materializing the KH*KW-expanded patches array in HBM.
    cols = [
        xp[:, i * dh:i * dh + sh * Hout:sh, j * dw:j * dw + sw * Wout:sw, :]
        for i in range(KH) for j in range(KW)
    ]
    patches = jnp.concatenate(cols, axis=-1).reshape(N * Hout * Wout, KH * KW * Cin)

    # Weight (tiny): (Cout, Cin, KH, KW) -> (KH, KW, Cin, Cout) -> (K, Cout),
    # matching the (kh, kw, cin) K ordering of the patches.
    w2d = weight.astype(jnp.bfloat16).transpose(2, 3, 1, 0).reshape(KH * KW * Cin, Cout)

    out = _conv_matmul(patches, w2d, bias)                        # (M, Cout) bf16
    out = out.reshape(N, Hout, Wout, Cout).transpose(0, 3, 1, 2)  # NCHW, bf16 (exact)
    return out.astype(jnp.float32)


# ---------------------------------------------------------------------------
# Pure-JAX reference for correctness check
# ---------------------------------------------------------------------------
def _reference(x, weight, bias, stride, padding, dilation):
    acc = jax.lax.conv_general_dilated(
        x, weight, window_strides=stride,
        padding=[(padding[0], padding[0]), (padding[1], padding[1])],
        rhs_dilation=dilation,
        dimension_numbers=("NCHW", "OIHW", "NCHW"),
    )
    acc = acc + bias.reshape(1, -1, 1, 1)
    return jnp.clip(jnp.round(acc), 0.0, 255.0)


if __name__ == "__main__":
    key = jax.random.PRNGKey(0)
    kx, kw = jax.random.split(key)

    # Small CIFAR-ish conv: Conv2d(4, 8, kernel_size=3, stride=1, padding=1)
    N, Cin, H, W = 2, 4, 16, 16
    Cout, KH, KW = 8, 3, 3
    stride, padding, dilation = (1, 1), (1, 1), (1, 1)

    # quint8-valued activations (scale=1.0, zero_point=0)
    x = jnp.round(jax.random.uniform(kx, (N, Cin, H, W), jnp.float32, 0.0, 8.0))
    # qint8-valued weights (scale=1.0, zero_point=0), deterministic init
    weight = jnp.round(
        jax.random.uniform(kw, (Cout, Cin, KH, KW), jnp.float32, -3.0, 3.0))
    # bias initialized to zeros, as in _ConvNd.__init__
    bias = jnp.zeros((Cout,), jnp.float32)

    out = quantized_conv2d(x, weight, bias,
                           stride=stride, padding=padding, dilation=dilation)
    out = jax.block_until_ready(out)

    ref = _reference(x, weight, bias, stride, padding, dilation)
    assert out.shape == (N, Cout, H, W), out.shape
    assert jnp.allclose(out, ref, atol=0.0), float(jnp.abs(out - ref).max())

    print("KERNEL_OK")
</pallas_src>

<mosaic_0001>
module attributes {stable_mosaic.version = 11 : i64} {
  func.func @_conv_kernel_single_k(%arg0: i32, %arg1: memref<512x36xbf16, #tpu.memory_space<vmem>>, %arg2: memref<36x128xbf16, #tpu.memory_space<vmem>>, %arg3: memref<1x128xf32, #tpu.memory_space<vmem>>, %arg4: memref<512x128xbf16, #tpu.memory_space<vmem>>) attributes {dimension_semantics = [#tpu.dimension_semantics<parallel>], iteration_bounds = array<i64: 1>, scalar_prefetch = 0 : i64, scratch_operands = 0 : i64, tpu.core_type = #tpu.core_type<tc>, window_params = [{transform_indices = @transform_0, window_bounds = array<i64: 512, 36>}, {pipeline_mode = #tpu.pipeline_mode<synchronous>, transform_indices = @transform_1, window_bounds = array<i64: 36, 128>}, {pipeline_mode = #tpu.pipeline_mode<synchronous>, transform_indices = @transform_2, window_bounds = array<i64: 1, 128>}, {transform_indices = @transform_3, window_bounds = array<i64: 512, 128>}]} {
    %c0 = arith.constant 0 : index
    %c0_0 = arith.constant 0 : index
    %0 = vector.load %arg1[%c0, %c0_0] : memref<512x36xbf16, #tpu.memory_space<vmem>>, vector<512x36xbf16>
    %c0_1 = arith.constant 0 : index
    %c0_2 = arith.constant 0 : index
    %1 = vector.load %arg2[%c0_1, %c0_2] : memref<36x128xbf16, #tpu.memory_space<vmem>>, vector<36x128xbf16>
    %cst = arith.constant dense<0.000000e+00> : vector<512x128xf32>
    %2 = tpu.matmul %0, %1, %cst {dimension_numbers = #tpu.dot_dimension_numbers<[1], [0], [0], [1], [0, 0, 1, 1], [], []>} : vector<512x36xbf16>, vector<36x128xbf16>, vector<512x128xf32> -> vector<512x128xf32>
    %c0_3 = arith.constant 0 : index
    %c0_4 = arith.constant 0 : index
    %3 = vector.load %arg3[%c0_3, %c0_4] : memref<1x128xf32, #tpu.memory_space<vmem>>, vector<1x128xf32>
    %4 = vector.broadcast %3 : vector<1x128xf32> to vector<512x128xf32>
    %5 = arith.addf %2, %4 : vector<512x128xf32>
    %6 = math.roundeven %5 : vector<512x128xf32>
    %cst_5 = arith.constant 0.000000e+00 : f32
    %cst_6 = arith.constant 2.550000e+02 : f32
    %7 = vector.broadcast %cst_5 : f32 to vector<512x128xf32>
    %8 = arith.maximumf %7, %6 : vector<512x128xf32>
    %9 = vector.broadcast %cst_6 : f32 to vector<512x128xf32>
    %10 = arith.minimumf %9, %8 : vector<512x128xf32>
    %11 = arith.truncf %10 : vector<512x128xf32> to vector<512x128xbf16>
    %c0_7 = arith.constant 0 : index
    %c0_8 = arith.constant 0 : index
    %12 = vector.load %arg4[%c0_7, %c0_8] : memref<512x128xbf16, #tpu.memory_space<vmem>>, vector<512x128xbf16>
    tpu.vector_store %arg4[%c0_7, %c0_8], %11 {strides = array<i32>} : memref<512x128xbf16, #tpu.memory_space<vmem>>, vector<512x128xbf16>,
    return
  }
  func.func @transform_0(%arg0: i32) -> (i32, i32) {
    %c0_i32 = arith.constant 0 : i32
    %c0_i32_0 = arith.constant 0 : i32
    return %arg0, %c0_i32 : i32, i32
  }
  func.func @transform_1(%arg0: i32) -> (i32, i32) {
    %c0_i32 = arith.constant 0 : i32
    %c0_i32_0 = arith.constant 0 : i32
    %c0_i32_1 = arith.constant 0 : i32
    return %c0_i32, %c0_i32_0 : i32, i32
  }
  func.func @transform_2(%arg0: i32) -> (i32, i32) {
    %c0_i32 = arith.constant 0 : i32
    %c0_i32_0 = arith.constant 0 : i32
    %c0_i32_1 = arith.constant 0 : i32
    return %c0_i32, %c0_i32_0 : i32, i32
  }
  func.func @transform_3(%arg0: i32) -> (i32, i32) {
    %c0_i32 = arith.constant 0 : i32
    %c0_i32_0 = arith.constant 0 : i32
    return %arg0, %c0_i32 : i32, i32
  }
}

</mosaic_0001>

<llo_original>
// kernel: quantized_conv2d.1
$region0: #{quantized_conv2d.1}
  #allocation0 [shape = 'u32[]', space=smem, size = 0x4, offset = 0x4, fixed_abs, tag = 'smem constant byte address 0x4 - core index']
  #allocation1 [shape = 'u32[144,128]{1,0:T(1,128)}', space=vmem, size = 0x12000, scoped, tag = 'internal scratch']
  %s0 = inlined_call_operand.vmem [shape: bf16[512,36], index: 0, kind: input, shape index: {}]
  %s1 = inlined_call_operand.vmem [shape: bf16[36,128], index: 1, kind: input, shape index: {}]
  %s2 = inlined_call_operand.vmem [shape: f32[1,128], index: 2, kind: input, shape index: {}]
  %s3 = inlined_call_operand.vmem [shape: bf16[512,128], index: 3, kind: output, shape index: {}]
  %s4 = sld [smem:[#allocation0]]
  $region22: #{quantized_conv2d.1} parent=0
    _
  %s6 = ssub.s32 1, %s4
  %s7 = scalar_select 0, %s6, %s4
  // Predicated region
  $region2: #{quantized_conv2d.1} parent=0 // pred_check
    _
  $region3: #{quantized_conv2d.1} parent=0 // pred_check_branch
    %9 = sbr.rel (0) target = $region5
  $region4: #{quantized_conv2d.1} parent=0 // pred_region
    _
  $region5: #{quantized_conv2d.1} parent=0 // pred_fallthru
    _
  // Predicated region
  $region6: #{quantized_conv2d.1} parent=0 // pred_check
    _
  $region7: #{quantized_conv2d.1} parent=0 // pred_check_branch
    %11 = sbr.rel (0) target = $region9
  $region8: #{quantized_conv2d.1} parent=0 // pred_region
    _
  $region9: #{quantized_conv2d.1} parent=0 // pred_fallthru
    _
  // Predicated region
  $region10: #{quantized_conv2d.1} parent=0 // pred_check
    _
  $region11: #{quantized_conv2d.1} parent=0 // pred_check_branch
    %13 = sbr.rel (0) target = $region13
  $region12: #{quantized_conv2d.1} parent=0 // pred_region
    _
  $region13: #{quantized_conv2d.1} parent=0 // pred_fallthru
    _
  %v15 = vld [vmem:[%s0] sm:$0xf]
  %v16 = vld [vmem:[%s0 + $0x4] sm:$0xf]
  %v17 = vld [vmem:[%s0 + $0x8] sm:$0xf]
  %v18 = vld [vmem:[%s0 + $0xc] sm:$0xf]
  %v19 = vld [vmem:[%s0 + $0x10] sm:$0xf]
  %v20 = vld [vmem:[%s0 + $0x14] sm:$0xf]
  %v21 = vld [vmem:[%s0 + $0x18] sm:$0xf]
  %v22 = vld [vmem:[%s0 + $0x1c] sm:$0xf]
  %v23 = vld [vmem:[%s0 + $0x20] sm:$0xf]
  %v24 = vld [vmem:[%s0 + $0x24] sm:$0xf]
  %v25 = vld [vmem:[%s0 + $0x28] sm:$0xf]
  %v26 = vld [vmem:[%s0 + $0x2c] sm:$0xf]
  %v27 = vld [vmem:[%s0 + $0x30] sm:$0xf]
  %v28 = vld [vmem:[%s0 + $0x34] sm:$0xf]
  %v29 = vld [vmem:[%s0 + $0x38] sm:$0xf]
  %v30 = vld [vmem:[%s0 + $0x3c] sm:$0xf]
  %v31 = vld [vmem:[%s0 + $0x40] sm:$0xf]
  %v32 = vld [vmem:[%s0 + $0x44] sm:$0xf]
  %v33 = vld [vmem:[%s0 + $0x48] sm:$0xf]
  %v34 = vld [vmem:[%s0 + $0x4c] sm:$0xf]
  %v35 = vld [vmem:[%s0 + $0x50] sm:$0xf]
  %v36 = vld [vmem:[%s0 + $0x54] sm:$0xf]
  %v37 = vld [vmem:[%s0 + $0x58] sm:$0xf]
  %v38 = vld [vmem:[%s0 + $0x5c] sm:$0xf]
  %v39 = vld [vmem:[%s0 + $0x60] sm:$0xf]
  %v40 = vld [vmem:[%s0 + $0x64] sm:$0xf]
  %v41 = vld [vmem:[%s0 + $0x68] sm:$0xf]
  %v42 = vld [vmem:[%s0 + $0x6c] sm:$0xf]
  %v43 = vld [vmem:[%s0 + $0x70] sm:$0xf]
  %v44 = vld [vmem:[%s0 + $0x74] sm:$0xf]
  %v45 = vld [vmem:[%s0 + $0x78] sm:$0xf]
  %v46 = vld [vmem:[%s0 + $0x7c] sm:$0xf]
  %v47 = vld [vmem:[%s0 + $0x80] sm:$0xf]
  %v48 = vld [vmem:[%s0 + $0x84] sm:$0xf]
  %v49 = vld [vmem:[%s0 + $0x88] sm:$0xf]
  %v50 = vld [vmem:[%s0 + $0x8c] sm:$0xf]
  %v51 = vld [vmem:[%s0 + $0x90] sm:$0xf]
  %v52 = vld [vmem:[%s0 + $0x94] sm:$0xf]
  %v53 = vld [vmem:[%s0 + $0x98] sm:$0xf]
  %v54 = vld [vmem:[%s0 + $0x9c] sm:$0xf]
  %v55 = vld [vmem:[%s0 + $0xa0] sm:$0xf]
  %v56 = vld [vmem:[%s0 + $0xa4] sm:$0xf]
  %v57 = vld [vmem:[%s0 + $0xa8] sm:$0xf]
  %v58 = vld [vmem:[%s0 + $0xac] sm:$0xf]
  %v59 = vld [vmem:[%s0 + $0xb0] sm:$0xf]
  %v60 = vld [vmem:[%s0 + $0xb4] sm:$0xf]
  %v61 = vld [vmem:[%s0 + $0xb8] sm:$0xf]
  %v62 = vld [vmem:[%s0 + $0xbc] sm:$0xf]
  %v63 = vld [vmem:[%s0 + $0xc0] sm:$0xf]
  %v64 = vld [vmem:[%s0 + $0xc4] sm:$0xf]
  %v65 = vld [vmem:[%s0 + $0xc8] sm:$0xf]
  %v66 = vld [vmem:[%s0 + $0xcc] sm:$0xf]
  %v67 = vld [vmem:[%s0 + $0xd0] sm:$0xf]
  %v68 = vld [vmem:[%s0 + $0xd4] sm:$0xf]
  %v69 = vld [vmem:[%s0 + $0xd8] sm:$0xf]
  %v70 = vld [vmem:[%s0 + $0xdc] sm:$0xf]
  %v71 = vld [vmem:[%s0 + $0xe0] sm:$0xf]
  %v72 = vld [vmem:[%s0 + $0xe4] sm:$0xf]
  %v73 = vld [vmem:[%s0 + $0xe8] sm:$0xf]
  %v74 = vld [vmem:[%s0 + $0xec] sm:$0xf]
  %v75 = vld [vmem:[%s0 + $0xf0] sm:$0xf]
  %v76 = vld [vmem:[%s0 + $0xf4] sm:$0xf]
  %v77 = vld [vmem:[%s0 + $0xf8] sm:$0xf]
  %v78 = vld [vmem:[%s0 + $0xfc] sm:$0xf]
  %v79 = vld [vmem:[%s1] sm:$0xf]
  %v80 = vld [vmem:[%s1 + $0x4] sm:$0xf]
  %v81 = vld [vmem:[%s1 + $0x8] sm:$0xf]
  %v82 = vld [vmem:[%s1 + $0xc] sm:$0xf]
  %v83 = vld [vmem:[%s1 + $0x10] sm:$0x3]
  %v84 = vld [vmem:[%s2] sm:$0x1]
  %v86 = vlaneseq
  %v87 = vshrl.u32 %v86, 7
  %v88 = vsub.s32 0, %v87
  %v89 = vrot.slane %v84, %v88
  %v155 = vunpack.c.l.b16 %v15
  %v156 = vunpack.c.l.b16 %v16
  %v157 = vunpack.c.l.b16 %v17
  %v158 = vunpack.c.l.b16 %v18
  %v159 = vunpack.c.l.b16 %v19
  %v160 = vunpack.c.l.b16 %v20
  %v161 = vunpack.c.l.b16 %v21
  %v162 = vunpack.c.l.b16 %v22
  %v163 = vunpack.c.l.b16 %v23
  %v164 = vunpack.c.l.b16 %v24
  %v165 = vunpack.c.l.b16 %v25
  %v166 = vunpack.c.l.b16 %v26
  %v167 = vunpack.c.l.b16 %v27
  %v168 = vunpack.c.l.b16 %v28
  %v169 = vunpack.c.l.b16 %v29
  %v170 = vunpack.c.l.b16 %v30
  %v171 = vunpack.c.l.b16 %v31
  %v172 = vunpack.c.l.b16 %v32
  %v173 = vunpack.c.l.b16 %v33
  %v174 = vunpack.c.l.b16 %v34
  %v175 = vunpack.c.l.b16 %v35
  %v176 = vunpack.c.l.b16 %v36
  %v177 = vunpack.c.l.b16 %v37
  %v178 = vunpack.c.l.b16 %v38
  %v179 = vunpack.c.l.b16 %v39
  %v180 = vunpack.c.l.b16 %v40
  %v181 = vunpack.c.l.b16 %v41
  %v182 = vunpack.c.l.b16 %v42
  %v183 = vunpack.c.l.b16 %v43
  %v184 = vunpack.c.l.b16 %v44
  %v185 = vunpack.c.l.b16 %v45
  %v186 = vunpack.c.l.b16 %v46
  %v187 = vunpack.c.l.b16 %v47
  %v188 = vunpack.c.l.b16 %v48
  %v189 = vunpack.c.l.b16 %v49
  %v190 = vunpack.c.l.b16 %v50
  %v191 = vunpack.c.l.b16 %v51
  %v192 = vunpack.c.l.b16 %v52
  %v193 = vunpack.c.l.b16 %v53
  %v194 = vunpack.c.l.b16 %v54
  %v195 = vunpack.c.l.b16 %v55
  %v196 = vunpack.c.l.b16 %v56
  %v197 = vunpack.c.l.b16 %v57
  %v198 = vunpack.c.l.b16 %v58
  %v199 = vunpack.c.l.b16 %v59
  %v200 = vunpack.c.l.b16 %v60
  %v201 = vunpack.c.l.b16 %v61
  %v202 = vunpack.c.l.b16 %v62
  %v203 = vunpack.c.l.b16 %v63
  %v204 = vunpack.c.l.b16 %v64
  %v205 = vunpack.c.l.b16 %v65
  %v206 = vunpack.c.l.b16 %v66
  %v207 = vunpack.c.l.b16 %v67
  %v208 = vunpack.c.l.b16 %v68
  %v209 = vunpack.c.l.b16 %v69
  %v210 = vunpack.c.l.b16 %v70
  %v211 = vunpack.c.l.b16 %v71
  %v212 = vunpack.c.l.b16 %v72
  %v213 = vunpack.c.l.b16 %v73
  %v214 = vunpack.c.l.b16 %v74
  %v215 = vunpack.c.l.b16 %v75
  %v216 = vunpack.c.l.b16 %v76
  %v217 = vunpack.c.l.b16 %v77
  %v218 = vunpack.c.l.b16 %v78
  %v219 = vpack.c.b16 %v156, %v155
  %v220 = vpack.c.b16 %v158, %v157
  %v221 = vpack.c.b16 %v160, %v159
  %v222 = vpack.c.b16 %v162, %v161
  %v223 = vpack.c.b16 %v164, %v163
  %v224 = vpack.c.b16 %v166, %v165
  %v225 = vpack.c.b16 %v168, %v167
  %v226 = vpack.c.b16 %v170, %v169
  %v227 = vpack.c.b16 %v172, %v171
  %v228 = vpack.c.b16 %v174, %v173
  %v229 = vpack.c.b16 %v176, %v175
  %v230 = vpack.c.b16 %v178, %v177
  %v231 = vpack.c.b16 %v180, %v179
  %v232 = vpack.c.b16 %v182, %v181
  %v233 = vpack.c.b16 %v184, %v183
  %v234 = vpack.c.b16 %v186, %v185
  %v235 = vpack.c.b16 %v188, %v187
  %v236 = vpack.c.b16 %v190, %v189
  %v237 = vpack.c.b16 %v192, %v191
  %v238 = vpack.c.b16 %v194, %v193
  %v239 = vpack.c.b16 %v196, %v195
  %v240 = vpack.c.b16 %v198, %v197
  %v241 = vpack.c.b16 %v200, %v199
  %v242 = vpack.c.b16 %v202, %v201
  %v243 = vpack.c.b16 %v204, %v203
  %v244 = vpack.c.b16 %v206, %v205
  %v245 = vpack.c.b16 %v208, %v207
  %v246 = vpack.c.b16 %v210, %v209
  %v247 = vpack.c.b16 %v212, %v211
  %v248 = vpack.c.b16 %v214, %v213
  %v249 = vpack.c.b16 %v216, %v215
  %v250 = vpack.c.b16 %v218, %v217
  %v256 = vunpack.c.l.b16 %v79
  %v257 = vunpack.c.l.b16 %v80
  %v258 = vunpack.c.l.b16 %v81
  %v259 = vunpack.c.l.b16 %v82
  %v260 = vunpack.c.l.b16 %v83
  %v261 = vpack.c.b16 %v257, %v256
  %v262 = vpack.c.b16 %v259, %v258
  %v263 = vpack.c.b16 %v260, %v260
  %vm266 = vcmask 293888
  %v268 = vsel %vm266, %v219, 0
  %v271 = vsel %vm266, %v220, 0
  %v274 = vsel %vm266, %v221, 0
  %v277 = vsel %vm266, %v222, 0
  %v280 = vsel %vm266, %v223, 0
  %v283 = vsel %vm266, %v224, 0
  %v286 = vsel %vm266, %v225, 0
  %v289 = vsel %vm266, %v226, 0
  %v292 = vsel %vm266, %v227, 0
  %v295 = vsel %vm266, %v228, 0
  %v298 = vsel %vm266, %v229, 0
  %v301 = vsel %vm266, %v230, 0
  %v304 = vsel %vm266, %v231, 0
  %v307 = vsel %vm266, %v232, 0
  %v310 = vsel %vm266, %v233, 0
  %v313 = vsel %vm266, %v234, 0
  %v316 = vsel %vm266, %v235, 0
  %v319 = vsel %vm266, %v236, 0
  %v322 = vsel %vm266, %v237, 0
  %v325 = vsel %vm266, %v238, 0
  %v328 = vsel %vm266, %v239, 0
  %v331 = vsel %vm266, %v240, 0
  %v334 = vsel %vm266, %v241, 0
  %v337 = vsel %vm266, %v242, 0
  %v340 = vsel %vm266, %v243, 0
  %v343 = vsel %vm266, %v244, 0
  %v346 = vsel %vm266, %v245, 0
  %v349 = vsel %vm266, %v246, 0
  %v352 = vsel %vm266, %v247, 0
  %v355 = vsel %vm266, %v248, 0
  %v358 = vsel %vm266, %v249, 0
  %v361 = vsel %vm266, %v250, 0
  %vm363 = vcmask 1041408
  %v365 = vsel %vm363, %v263, 0
  %367 = vmatprep.subr.bf16.mxu0 0
  %368 = vmatpush1.bf16.msra.mxu0 %v261
  %369 = vmatprep.subr.bf16.mxu0 0
  %370 = vmatpush1.bf16.msra.mxu0 %v262
  %371 = vmatprep.subr.bf16.mxu0 0
  %372 = vmatpush1.bf16.msra.mxu0 %v365
  %373 = vmatprep.subr.bf16.mxu0 0
  %374 = vmatpush1.bf16.msra.mxu0 0
  %375 = vmatprep.subr.bf16.mxu0 0
  %376 = vmatpush1.bf16.msra.mxu0 0
  %377 = vmatprep.subr.bf16.mxu0 0
  %378 = vmatpush1.bf16.msra.mxu0 0
  %379 = vmatprep.subr.bf16.mxu0 0
  %380 = vmatpush1.bf16.msra.mxu0 0
  %381 = vmatprep.subr.bf16.mxu0 0
  %382 = vmatpush1.bf16.msra.mxu0 0
  %383 = vmatprep.subr.bf16.mxu0 0
  %384 = vmatpush1.bf16.msra.mxu0 0
  %385 = vmatprep.subr.bf16.mxu0 0
  %386 = vmatpush1.bf16.msra.mxu0 0
  %387 = vmatprep.subr.bf16.mxu0 0
  %388 = vmatpush1.bf16.msra.mxu0 0
  %389 = vmatprep.subr.bf16.mxu0 0
  %390 = vmatpush1.bf16.msra.mxu0 0
  %391 = vmatprep.subr.bf16.mxu0 0
  %392 = vmatpush1.bf16.msra.mxu0 0
  %393 = vmatprep.subr.bf16.mxu0 0
  %394 = vmatpush1.bf16.msra.mxu0 0
  %395 = vmatprep.subr.bf16.mxu0 0
  %396 = vmatpush1.bf16.msra.mxu0 0
  %397 = vmatprep.subr.bf16.mxu0 0
  %398 = vmatpush1.bf16.msra.mxu0 0
  %399 = vmatprep.mubr.bf16.mxu0 0
  %400 = vmatmul.mubr.bf16.gmra.mrb[0].mxu0 %v268
  %v401 = vpop.f32.mrb[0].mxu0
  %v402 = vadd.f32 %v89, %v401
  %v403 = vpop.f32.mrb[0].mxu0
  %v404 = vpop.f32.mrb[0].mxu0
  %v405 = vadd.f32 %v89, %v404
  %v406 = vpop.f32.mrb[0].mxu0
  %407 = vmatprep.mubr.bf16.mxu0 0
  %408 = vmatmul.mubr.bf16.gmra.mrb[0].mxu0 %v271
  %v409 = vpop.f32.mrb[0].mxu0
  %v410 = vadd.f32 %v89, %v409
  %v411 = vpop.f32.mrb[0].mxu0
  %v412 = vpop.f32.mrb[0].mxu0
  %v413 = vadd.f32 %v89, %v412
  %v414 = vpop.f32.mrb[0].mxu0
  %415 = vmatprep.mubr.bf16.mxu0 0
  %416 = vmatmul.mubr.bf16.gmra.mrb[0].mxu0 %v274
  %v417 = vpop.f32.mrb[0].mxu0
  %v418 = vadd.f32 %v89, %v417
  %v419 = vpop.f32.mrb[0].mxu0
  %v420 = vpop.f32.mrb[0].mxu0
  %v421 = vadd.f32 %v89, %v420
  %v422 = vpop.f32.mrb[0].mxu0
  %423 = vmatprep.mubr.bf16.mxu0 0
  %424 = vmatmul.mubr.bf16.gmra.mrb[0].mxu0 %v277
  %v425 = vpop.f32.mrb[0].mxu0
  %v426 = vadd.f32 %v89, %v425
  %v427 = vpop.f32.mrb[0].mxu0
  %v428 = vpop.f32.mrb[0].mxu0
  %v429 = vadd.f32 %v89, %v428
  %v430 = vpop.f32.mrb[0].mxu0
  %431 = vmatprep.mubr.bf16.mxu0 0
  %432 = vmatmul.mubr.bf16.gmra.mrb[0].mxu0 %v280
  %v433 = vpop.f32.mrb[0].mxu0
  %v434 = vadd.f32 %v89, %v433
  %v435 = vpop.f32.mrb[0].mxu0
  %v436 = vpop.f32.mrb[0].mxu0
  %v437 = vadd.f32 %v89, %v436
  %v438 = vpop.f32.mrb[0].mxu0
  %439 = vmatprep.mubr.bf16.mxu0 0
  %440 = vmatmul.mubr.bf16.gmra.mrb[0].mxu0 %v283
  %v441 = vpop.f32.mrb[0].mxu0
  %v442 = vadd.f32 %v89, %v441
  %v443 = vpop.f32.mrb[0].mxu0
  %v444 = vpop.f32.mrb[0].mxu0
  %v445 = vadd.f32 %v89, %v444
  %v446 = vpop.f32.mrb[0].mxu0
  %447 = vmatprep.mubr.bf16.mxu0 0
  %448 = vmatmul.mubr.bf16.gmra.mrb[0].mxu0 %v286
  %v449 = vpop.f32.mrb[0].mxu0
  %v450 = vadd.f32 %v89, %v449
  %v451 = vpop.f32.mrb[0].mxu0
  %v452 = vpop.f32.mrb[0].mxu0
  %v453 = vadd.f32 %v89, %v452
  %v454 = vpop.f32.mrb[0].mxu0
  %455 = vmatprep.mubr.bf16.mxu0 0
  %456 = vmatmul.mubr.bf16.gmra.mrb[0].mxu0 %v289
  %v457 = vpop.f32.mrb[0].mxu0
  %v458 = vadd.f32 %v89, %v457
  %v459 = vpop.f32.mrb[0].mxu0
  %v460 = vpop.f32.mrb[0].mxu0
  %v461 = vadd.f32 %v89, %v460
  %v462 = vpop.f32.mrb[0].mxu0
  %463 = vmatprep.mubr.bf16.mxu0 0
  %464 = vmatmul.mubr.bf16.gmra.mrb[0].mxu0 %v292
  %v465 = vpop.f32.mrb[0].mxu0
  %v466 = vadd.f32 %v89, %v465
  %v467 = vpop.f32.mrb[0].mxu0
  %v468 = vpop.f32.mrb[0].mxu0
  %v469 = vadd.f32 %v89, %v468
  %v470 = vpop.f32.mrb[0].mxu0
  %471 = vmatprep.mubr.bf16.mxu0 0
  %472 = vmatmul.mubr.bf16.gmra.mrb[0].mxu0 %v295
  %v473 = vpop.f32.mrb[0].mxu0
  %v474 = vadd.f32 %v89, %v473
  %v475 = vpop.f32.mrb[0].mxu0
  %v476 = vpop.f32.mrb[0].mxu0
  %v477 = vadd.f32 %v89, %v476
  %v478 = vpop.f32.mrb[0].mxu0
  %479 = vmatprep.mubr.bf16.mxu0 0
  %480 = vmatmul.mubr.bf16.gmra.mrb[0].mxu0 %v298
  %v481 = vpop.f32.mrb[0].mxu0
  %v482 = vadd.f32 %v89, %v481
  %v483 = vpop.f32.mrb[0].mxu0
  %v484 = vpop.f32.mrb[0].mxu0
  %v485 = vadd.f32 %v89, %v484
  %v486 = vpop.f32.mrb[0].mxu0
  %487 = vmatprep.mubr.bf16.mxu0 0
  %488 = vmatmul.mubr.bf16.gmra.mrb[0].mxu0 %v301
  %v489 = vpop.f32.mrb[0].mxu0
  %v490 = vadd.f32 %v89, %v489
  %v491 = vpop.f32.mrb[0].mxu0
  %v492 = vpop.f32.mrb[0].mxu0
  %v493 = vadd.f32 %v89, %v492
  %v494 = vpop.f32.mrb[0].mxu0
  %495 = vmatprep.mubr.bf16.mxu0 0
  %496 = vmatmul.mubr.bf16.gmra.mrb[0].mxu0 %v304
  %v497 = vpop.f32.mrb[0].mxu0
  %v498 = vadd.f32 %v89, %v497
  %v499 = vpop.f32.mrb[0].mxu0
  %v500 = vpop.f32.mrb[0].mxu0
  %v501 = vadd.f32 %v89, %v500
  %v502 = vpop.f32.mrb[0].mxu0
  %503 = vmatprep.mubr.bf16.mxu0 0
  %504 = vmatmul.mubr.bf16.gmra.mrb[0].mxu0 %v307
  %v505 = vpop.f32.mrb[0].mxu0
  %v506 = vadd.f32 %v89, %v505
  %v507 = vpop.f32.mrb[0].mxu0
  %v508 = vpop.f32.mrb[0].mxu0
  %v509 = vadd.f32 %v89, %v508
  %v510 = vpop.f32.mrb[0].mxu0
  %511 = vmatprep.mubr.bf16.mxu0 0
  %512 = vmatmul.mubr.bf16.gmra.mrb[0].mxu0 %v310
  %v513 = vpop.f32.mrb[0].mxu0
  %v514 = vadd.f32 %v89, %v513
  %v515 = vpop.f32.mrb[0].mxu0
  %v516 = vpop.f32.mrb[0].mxu0
  %v517 = vadd.f32 %v89, %v516
  %v518 = vpop.f32.mrb[0].mxu0
  %519 = vmatprep.mubr.bf16.mxu0 0
  %520 = vmatmul.mubr.bf16.gmra.mrb[0].mxu0 %v313
  %v521 = vpop.f32.mrb[0].mxu0
  %v522 = vadd.f32 %v89, %v521
  %v523 = vpop.f32.mrb[0].mxu0
  %v524 = vpop.f32.mrb[0].mxu0
  %v525 = vadd.f32 %v89, %v524
  %v526 = vpop.f32.mrb[0].mxu0
  %527 = vmatprep.mubr.bf16.mxu0 0
  %528 = vmatmul.mubr.bf16.gmra.mrb[0].mxu0 %v316
  %v529 = vpop.f32.mrb[0].mxu0
  %v530 = vadd.f32 %v89, %v529
  %v531 = vpop.f32.mrb[0].mxu0
  %v532 = vpop.f32.mrb[0].mxu0
  %v533 = vadd.f32 %v89, %v532
  %v534 = vpop.f32.mrb[0].mxu0
  %535 = vmatprep.mubr.bf16.mxu0 0
  %536 = vmatmul.mubr.bf16.gmra.mrb[0].mxu0 %v319
  %v537 = vpop.f32.mrb[0].mxu0
  %v538 = vadd.f32 %v89, %v537
  %v539 = vpop.f32.mrb[0].mxu0
  %v540 = vpop.f32.mrb[0].mxu0
  %v541 = vadd.f32 %v89, %v540
  %v542 = vpop.f32.mrb[0].mxu0
  %543 = vmatprep.mubr.bf16.mxu0 0
  %544 = vmatmul.mubr.bf16.gmra.mrb[0].mxu0 %v322
  %v545 = vpop.f32.mrb[0].mxu0
  %v546 = vadd.f32 %v89, %v545
  %v547 = vpop.f32.mrb[0].mxu0
  %v548 = vpop.f32.mrb[0].mxu0
  %v549 = vadd.f32 %v89, %v548
  %v550 = vpop.f32.mrb[0].mxu0
  %551 = vmatprep.mubr.bf16.mxu0 0
  %552 = vmatmul.mubr.bf16.gmra.mrb[0].mxu0 %v325
  %v553 = vpop.f32.mrb[0].mxu0
  %v554 = vadd.f32 %v89, %v553
  %v555 = vpop.f32.mrb[0].mxu0
  %v556 = vpop.f32.mrb[0].mxu0
  %v557 = vadd.f32 %v89, %v556
  %v558 = vpop.f32.mrb[0].mxu0
  %559 = vmatprep.mubr.bf16.mxu0 0
  %560 = vmatmul.mubr.bf16.gmra.mrb[0].mxu0 %v328
  %v561 = vpop.f32.mrb[0].mxu0
  %v562 = vadd.f32 %v89, %v561
  %v563 = vpop.f32.mrb[0].mxu0
  %v564 = vpop.f32.mrb[0].mxu0
  %v565 = vadd.f32 %v89, %v564
  %v566 = vpop.f32.mrb[0].mxu0
  %567 = vmatprep.mubr.bf16.mxu0 0
  %568 = vmatmul.mubr.bf16.gmra.mrb[0].mxu0 %v331
  %v569 = vpop.f32.mrb[0].mxu0
  %v570 = vadd.f32 %v89, %v569
  %v571 = vpop.f32.mrb[0].mxu0
  %v572 = vpop.f32.mrb[0].mxu0
  %v573 = vadd.f32 %v89, %v572
  %v574 = vpop.f32.mrb[0].mxu0
  %575 = vmatprep.mubr.bf16.mxu0 0
  %576 = vmatmul.mubr.bf16.gmra.mrb[0].mxu0 %v334
  %v577 = vpop.f32.mrb[0].mxu0
  %v578 = vadd.f32 %v89, %v577
  %v579 = vpop.f32.mrb[0].mxu0
  %v580 = vpop.f32.mrb[0].mxu0
  %v581 = vadd.f32 %v89, %v580
  %v582 = vpop.f32.mrb[0].mxu0
  %583 = vmatprep.mubr.bf16.mxu0 0
  %584 = vmatmul.mubr.bf16.gmra.mrb[0].mxu0 %v337
  %v585 = vpop.f32.mrb[0].mxu0
  %v586 = vadd.f32 %v89, %v585
  %v587 = vpop.f32.mrb[0].mxu0
  %v588 = vpop.f32.mrb[0].mxu0
  %v589 = vadd.f32 %v89, %v588
  %v590 = vpop.f32.mrb[0].mxu0
  %591 = vmatprep.mubr.bf16.mxu0 0
  %592 = vmatmul.mubr.bf16.gmra.mrb[0].mxu0 %v340
  %v593 = vpop.f32.mrb[0].mxu0
  %v594 = vadd.f32 %v89, %v593
  %v595 = vpop.f32.mrb[0].mxu0
  %v596 = vpop.f32.mrb[0].mxu0
  %v597 = vadd.f32 %v89, %v596
  %v598 = vpop.f32.mrb[0].mxu0
  %599 = vmatprep.mubr.bf16.mxu0 0
  %600 = vmatmul.mubr.bf16.gmra.mrb[0].mxu0 %v343
  %v601 = vpop.f32.mrb[0].mxu0
  %v602 = vadd.f32 %v89, %v601
  %v603 = vpop.f32.mrb[0].mxu0
  %v604 = vpop.f32.mrb[0].mxu0
  %v605 = vadd.f32 %v89, %v604
  %v606 = vpop.f32.mrb[0].mxu0
  %607 = vmatprep.mubr.bf16.mxu0 0
  %608 = vmatmul.mubr.bf16.gmra.mrb[0].mxu0 %v346
  %v609 = vpop.f32.mrb[0].mxu0
  %v610 = vadd.f32 %v89, %v609
  %v611 = vpop.f32.mrb[0].mxu0
  %v612 = vpop.f32.mrb[0].mxu0
  %v613 = vadd.f32 %v89, %v612
  %v614 = vpop.f32.mrb[0].mxu0
  %615 = vmatprep.mubr.bf16.mxu0 0
  %616 = vmatmul.mubr.bf16.gmra.mrb[0].mxu0 %v349
  %v617 = vpop.f32.mrb[0].mxu0
  %v618 = vadd.f32 %v89, %v617
  %v619 = vpop.f32.mrb[0].mxu0
  %v620 = vpop.f32.mrb[0].mxu0
  %v621 = vadd.f32 %v89, %v620
  %v622 = vpop.f32.mrb[0].mxu0
  %623 = vmatprep.mubr.bf16.mxu0 0
  %624 = vmatmul.mubr.bf16.gmra.mrb[0].mxu0 %v352
  %v625 = vpop.f32.mrb[0].mxu0
  %v626 = vadd.f32 %v89, %v625
  %v627 = vpop.f32.mrb[0].mxu0
  %v628 = vpop.f32.mrb[0].mxu0
  %v629 = vadd.f32 %v89, %v628
  %v630 = vpop.f32.mrb[0].mxu0
  %631 = vmatprep.mubr.bf16.mxu0 0
  %632 = vmatmul.mubr.bf16.gmra.mrb[0].mxu0 %v355
  %v633 = vpop.f32.mrb[0].mxu0
  %v634 = vadd.f32 %v89, %v633
  %v635 = vpop.f32.mrb[0].mxu0
  %v636 = vpop.f32.mrb[0].mxu0
  %v637 = vadd.f32 %v89, %v636
  %v638 = vpop.f32.mrb[0].mxu0
  %639 = vmatprep.mubr.bf16.mxu0 0
  %640 = vmatmul.mubr.bf16.gmra.mrb[0].mxu0 %v358
  %v641 = vpop.f32.mrb[0].mxu0
  %v642 = vadd.f32 %v89, %v641
  %v643 = vpop.f32.mrb[0].mxu0
  %v644 = vpop.f32.mrb[0].mxu0
  %v645 = vadd.f32 %v89, %v644
  %v646 = vpop.f32.mrb[0].mxu0
  %647 = vmatprep.mubr.bf16.mxu0 0
  %648 = vmatmul.mubr.bf16.gmra.mrb[0].mxu0 %v361
  %v649 = vpop.f32.mrb[0].mxu0
  %v650 = vadd.f32 %v89, %v649
  %v651 = vpop.f32.mrb[0].mxu0
  %v652 = vpop.f32.mrb[0].mxu0
  %v653 = vadd.f32 %v89, %v652
  %v654 = vpop.f32.mrb[0].mxu0
  %655 = vdwg.mxu0
  %v656 = vround.ne.pseudo %v402
  %v657 = vround.ne.pseudo %v405
  %v658 = vround.ne.pseudo %v410
  %v659 = vround.ne.pseudo %v413
  %v660 = vround.ne.pseudo %v418
  %v661 = vround.ne.pseudo %v421
  %v662 = vround.ne.pseudo %v426
  %v663 = vround.ne.pseudo %v429
  %v664 = vround.ne.pseudo %v434
  %v665 = vround.ne.pseudo %v437
  %v666 = vround.ne.pseudo %v442
  %v667 = vround.ne.pseudo %v445
  %v668 = vround.ne.pseudo %v450
  %v669 = vround.ne.pseudo %v453
  %v670 = vround.ne.pseudo %v458
  %v671 = vround.ne.pseudo %v461
  %v672 = vround.ne.pseudo %v466
  %v673 = vround.ne.pseudo %v469
  %v674 = vround.ne.pseudo %v474
  %v675 = vround.ne.pseudo %v477
  %v676 = vround.ne.pseudo %v482
  %v677 = vround.ne.pseudo %v485
  %v678 = vround.ne.pseudo %v490
  %v679 = vround.ne.pseudo %v493
  %v680 = vround.ne.pseudo %v498
  %v681 = vround.ne.pseudo %v501
  %v682 = vround.ne.pseudo %v506
  %v683 = vround.ne.pseudo %v509
  %v684 = vround.ne.pseudo %v514
  %v685 = vround.ne.pseudo %v517
  %v686 = vround.ne.pseudo %v522
  %v687 = vround.ne.pseudo %v525
  %v688 = vround.ne.pseudo %v530
  %v689 = vround.ne.pseudo %v533
  %v690 = vround.ne.pseudo %v538
  %v691 = vround.ne.pseudo %v541
  %v692 = vround.ne.pseudo %v546
  %v693 = vround.ne.pseudo %v549
  %v694 = vround.ne.pseudo %v554
  %v695 = vround.ne.pseudo %v557
  %v696 = vround.ne.pseudo %v562
  %v697 = vround.ne.pseudo %v565
  %v698 = vround.ne.pseudo %v570
  %v699 = vround.ne.pseudo %v573
  %v700 = vround.ne.pseudo %v578
  %v701 = vround.ne.pseudo %v581
  %v702 = vround.ne.pseudo %v586
  %v703 = vround.ne.pseudo %v589
  %v704 = vround.ne.pseudo %v594
  %v705 = vround.ne.pseudo %v597
  %v706 = vround.ne.pseudo %v602
  %v707 = vround.ne.pseudo %v605
  %v708 = vround.ne.pseudo %v610
  %v709 = vround.ne.pseudo %v613
  %v710 = vround.ne.pseudo %v618
  %v711 = vround.ne.pseudo %v621
  %v712 = vround.ne.pseudo %v626
  %v713 = vround.ne.pseudo %v629
  %v714 = vround.ne.pseudo %v634
  %v715 = vround.ne.pseudo %v637
  %v716 = vround.ne.pseudo %v642
  %v717 = vround.ne.pseudo %v645
  %v718 = vround.ne.pseudo %v650
  %v719 = vround.ne.pseudo %v653
  %v720 = vmax.f32 %v656, 0.0
  %v721 = vmax.f32 %v657, 0.0
  %v722 = vmax.f32 %v658, 0.0
  %v723 = vmax.f32 %v659, 0.0
  %v724 = vmax.f32 %v660, 0.0
  %v725 = vmax.f32 %v661, 0.0
  %v726 = vmax.f32 %v662, 0.0
  %v727 = vmax.f32 %v663, 0.0
  %v728 = vmax.f32 %v664, 0.0
  %v729 = vmax.f32 %v665, 0.0
  %v730 = vmax.f32 %v666, 0.0
  %v731 = vmax.f32 %v667, 0.0
  %v732 = vmax.f32 %v668, 0.0
  %v733 = vmax.f32 %v669, 0.0
  %v734 = vmax.f32 %v670, 0.0
  %v735 = vmax.f32 %v671, 0.0
  %v736 = vmax.f32 %v672, 0.0
  %v737 = vmax.f32 %v673, 0.0
  %v738 = vmax.f32 %v674, 0.0
  %v739 = vmax.f32 %v675, 0.0
  %v740 = vmax.f32 %v676, 0.0
  %v741 = vmax.f32 %v677, 0.0
  %v742 = vmax.f32 %v678, 0.0
  %v743 = vmax.f32 %v679, 0.0
  %v744 = vmax.f32 %v680, 0.0
  %v745 = vmax.f32 %v681, 0.0
  %v746 = vmax.f32 %v682, 0.0
  %v747 = vmax.f32 %v683, 0.0
  %v748 = vmax.f32 %v684, 0.0
  %v749 = vmax.f32 %v685, 0.0
  %v750 = vmax.f32 %v686, 0.0
  %v751 = vmax.f32 %v687, 0.0
  %v752 = vmax.f32 %v688, 0.0
  %v753 = vmax.f32 %v689, 0.0
  %v754 = vmax.f32 %v690, 0.0
  %v755 = vmax.f32 %v691, 0.0
  %v756 = vmax.f32 %v692, 0.0
  %v757 = vmax.f32 %v693, 0.0
  %v758 = vmax.f32 %v694, 0.0
  %v759 = vmax.f32 %v695, 0.0
  %v760 = vmax.f32 %v696, 0.0
  %v761 = vmax.f32 %v697, 0.0
  %v762 = vmax.f32 %v698, 0.0
  %v763 = vmax.f32 %v699, 0.0
  %v764 = vmax.f32 %v700, 0.0
  %v765 = vmax.f32 %v701, 0.0
  %v766 = vmax.f32 %v702, 0.0
  %v767 = vmax.f32 %v703, 0.0
  %v768 = vmax.f32 %v704, 0.0
  %v769 = vmax.f32 %v705, 0.0
  %v770 = vmax.f32 %v706, 0.0
  %v771 = vmax.f32 %v707, 0.0
  %v772 = vmax.f32 %v708, 0.0
  %v773 = vmax.f32 %v709, 0.0
  %v774 = vmax.f32 %v710, 0.0
  %v775 = vmax.f32 %v711, 0.0
  %v776 = vmax.f32 %v712, 0.0
  %v777 = vmax.f32 %v713, 0.0
  %v778 = vmax.f32 %v714, 0.0
  %v779 = vmax.f32 %v715, 0.0
  %v780 = vmax.f32 %v716, 0.0
  %v781 = vmax.f32 %v717, 0.0
  %v782 = vmax.f32 %v718, 0.0
  %v783 = vmax.f32 %v719, 0.0
  %v784 = vmin.f32 %v720, 255.0
  %v785 = vmin.f32 %v721, 255.0
  %v786 = vmin.f32 %v722, 255.0
  %v787 = vmin.f32 %v723, 255.0
  %v788 = vmin.f32 %v724, 255.0
  %v789 = vmin.f32 %v725, 255.0
  %v790 = vmin.f32 %v726, 255.0
  %v791 = vmin.f32 %v727, 255.0
  %v792 = vmin.f32 %v728, 255.0
  %v793 = vmin.f32 %v729, 255.0
  %v794 = vmin.f32 %v730, 255.0
  %v795 = vmin.f32 %v731, 255.0
  %v796 = vmin.f32 %v732, 255.0
  %v797 = vmin.f32 %v733, 255.0
  %v798 = vmin.f32 %v734, 255.0
  %v799 = vmin.f32 %v735, 255.0
  %v800 = vmin.f32 %v736, 255.0
  %v801 = vmin.f32 %v737, 255.0
  %v802 = vmin.f32 %v738, 255.0
  %v803 = vmin.f32 %v739, 255.0
  %v804 = vmin.f32 %v740, 255.0
  %v805 = vmin.f32 %v741, 255.0
  %v806 = vmin.f32 %v742, 255.0
  %v807 = vmin.f32 %v743, 255.0
  %v808 = vmin.f32 %v744, 255.0
  %v809 = vmin.f32 %v745, 255.0
  %v810 = vmin.f32 %v746, 255.0
  %v811 = vmin.f32 %v747, 255.0
  %v812 = vmin.f32 %v748, 255.0
  %v813 = vmin.f32 %v749, 255.0
  %v814 = vmin.f32 %v750, 255.0
  %v815 = vmin.f32 %v751, 255.0
  %v816 = vmin.f32 %v752, 255.0
  %v817 = vmin.f32 %v753, 255.0
  %v818 = vmin.f32 %v754, 255.0
  %v819 = vmin.f32 %v755, 255.0
  %v820 = vmin.f32 %v756, 255.0
  %v821 = vmin.f32 %v757, 255.0
  %v822 = vmin.f32 %v758, 255.0
  %v823 = vmin.f32 %v759, 255.0
  %v824 = vmin.f32 %v760, 255.0
  %v825 = vmin.f32 %v761, 255.0
  %v826 = vmin.f32 %v762, 255.0
  %v827 = vmin.f32 %v763, 255.0
  %v828 = vmin.f32 %v764, 255.0
  %v829 = vmin.f32 %v765, 255.0
  %v830 = vmin.f32 %v766, 255.0
  %v831 = vmin.f32 %v767, 255.0
  %v832 = vmin.f32 %v768, 255.0
  %v833 = vmin.f32 %v769, 255.0
  %v834 = vmin.f32 %v770, 255.0
  %v835 = vmin.f32 %v771, 255.0
  %v836 = vmin.f32 %v772, 255.0
  %v837 = vmin.f32 %v773, 255.0
  %v838 = vmin.f32 %v774, 255.0
  %v839 = vmin.f32 %v775, 255.0
  %v840 = vmin.f32 %v776, 255.0
  %v841 = vmin.f32 %v777, 255.0
  %v842 = vmin.f32 %v778, 255.0
  %v843 = vmin.f32 %v779, 255.0
  %v844 = vmin.f32 %v780, 255.0
  %v845 = vmin.f32 %v781, 255.0
  %v846 = vmin.f32 %v782, 255.0
  %v847 = vmin.f32 %v783, 255.0
  %v848 = vpack.c.bf16 %v785, %v784
  %v849 = vpack.c.bf16 %v787, %v786
  %v850 = vpack.c.bf16 %v789, %v788
  %v851 = vpack.c.bf16 %v791, %v790
  %v852 = vpack.c.bf16 %v793, %v792
  %v853 = vpack.c.bf16 %v795, %v794
  %v854 = vpack.c.bf16 %v797, %v796
  %v855 = vpack.c.bf16 %v799, %v798
  %v856 = vpack.c.bf16 %v801, %v800
  %v857 = vpack.c.bf16 %v803, %v802
  %v858 = vpack.c.bf16 %v805, %v804
  %v859 = vpack.c.bf16 %v807, %v806
  %v860 = vpack.c.bf16 %v809, %v808
  %v861 = vpack.c.bf16 %v811, %v810
  %v862 = vpack.c.bf16 %v813, %v812
  %v863 = vpack.c.bf16 %v815, %v814
  %v864 = vpack.c.bf16 %v817, %v816
  %v865 = vpack.c.bf16 %v819, %v818
  %v866 = vpack.c.bf16 %v821, %v820
  %v867 = vpack.c.bf16 %v823, %v822
  %v868 = vpack.c.bf16 %v825, %v824
  %v869 = vpack.c.bf16 %v827, %v826
  %v870 = vpack.c.bf16 %v829, %v828
  %v871 = vpack.c.bf16 %v831, %v830
  %v872 = vpack.c.bf16 %v833, %v832
  %v873 = vpack.c.bf16 %v835, %v834
  %v874 = vpack.c.bf16 %v837, %v836
  %v875 = vpack.c.bf16 %v839, %v838
  %v876 = vpack.c.bf16 %v841, %v840
  %v877 = vpack.c.bf16 %v843, %v842
  %v878 = vpack.c.bf16 %v845, %v844
  %v879 = vpack.c.bf16 %v847, %v846
  %v912 = vunpack.c.l.b16 %v848
  %v913 = vunpack.c.h.b16 %v848
  %v914 = vunpack.c.l.b16 %v849
  %v915 = vunpack.c.h.b16 %v849
  %v916 = vunpack.c.l.b16 %v850
  %v917 = vunpack.c.h.b16 %v850
  %v918 = vunpack.c.l.b16 %v851
  %v919 = vunpack.c.h.b16 %v851
  %v920 = vunpack.c.l.b16 %v852
  %v921 = vunpack.c.h.b16 %v852
  %v922 = vunpack.c.l.b16 %v853
  %v923 = vunpack.c.h.b16 %v853
  %v924 = vunpack.c.l.b16 %v854
  %v925 = vunpack.c.h.b16 %v854
  %v926 = vunpack.c.l.b16 %v855
  %v927 = vunpack.c.h.b16 %v855
  %v928 = vunpack.c.l.b16 %v856
  %v929 = vunpack.c.h.b16 %v856
  %v930 = vunpack.c.l.b16 %v857
  %v931 = vunpack.c.h.b16 %v857
  %v932 = vunpack.c.l.b16 %v858
  %v933 = vunpack.c.h.b16 %v858
  %v934 = vunpack.c.l.b16 %v859
  %v935 = vunpack.c.h.b16 %v859
  %v936 = vunpack.c.l.b16 %v860
  %v937 = vunpack.c.h.b16 %v860
  %v938 = vunpack.c.l.b16 %v861
  %v939 = vunpack.c.h.b16 %v861
  %v940 = vunpack.c.l.b16 %v862
  %v941 = vunpack.c.h.b16 %v862
  %v942 = vunpack.c.l.b16 %v863
  %v943 = vunpack.c.h.b16 %v863
  %v944 = vunpack.c.l.b16 %v864
  %v945 = vunpack.c.h.b16 %v864
  %v946 = vunpack.c.l.b16 %v865
  %v947 = vunpack.c.h.b16 %v865
  %v948 = vunpack.c.l.b16 %v866
  %v949 = vunpack.c.h.b16 %v866
  %v950 = vunpack.c.l.b16 %v867
  %v951 = vunpack.c.h.b16 %v867
  %v952 = vunpack.c.l.b16 %v868
  %v953 = vunpack.c.h.b16 %v868
  %v954 = vunpack.c.l.b16 %v869
  %v955 = vunpack.c.h.b16 %v869
  %v956 = vunpack.c.l.b16 %v870
  %v957 = vunpack.c.h.b16 %v870
  %v958 = vunpack.c.l.b16 %v871
  %v959 = vunpack.c.h.b16 %v871
  %v960 = vunpack.c.l.b16 %v872
  %v961 = vunpack.c.h.b16 %v872
  %v962 = vunpack.c.l.b16 %v873
  %v963 = vunpack.c.h.b16 %v873
  %v964 = vunpack.c.l.b16 %v874
  %v965 = vunpack.c.h.b16 %v874
  %v966 = vunpack.c.l.b16 %v875
  %v967 = vunpack.c.h.b16 %v875
  %v968 = vunpack.c.l.b16 %v876
  %v969 = vunpack.c.h.b16 %v876
  %v970 = vunpack.c.l.b16 %v877
  %v971 = vunpack.c.h.b16 %v877
  %v972 = vunpack.c.l.b16 %v878
  %v973 = vunpack.c.h.b16 %v878
  %v974 = vunpack.c.l.b16 %v879
  %v975 = vunpack.c.h.b16 %v879
  %v976 = vpack.c.b16 %v912, %v912
  %v977 = vpack.c.b16 %v913, %v913
  %v978 = vpack.c.b16 %v914, %v914
  %v979 = vpack.c.b16 %v915, %v915
  %v980 = vpack.c.b16 %v916, %v916
  %v981 = vpack.c.b16 %v917, %v917
  %v982 = vpack.c.b16 %v918, %v918
  %v983 = vpack.c.b16 %v919, %v919
  %v984 = vpack.c.b16 %v920, %v920
  %v985 = vpack.c.b16 %v921, %v921
  %v986 = vpack.c.b16 %v922, %v922
  %v987 = vpack.c.b16 %v923, %v923
  %v988 = vpack.c.b16 %v924, %v924
  %v989 = vpack.c.b16 %v925, %v925
  %v990 = vpack.c.b16 %v926, %v926
  %v991 = vpack.c.b16 %v927, %v927
  %v992 = vpack.c.b16 %v928, %v928
  %v993 = vpack.c.b16 %v929, %v929
  %v994 = vpack.c.b16 %v930, %v930
  %v995 = vpack.c.b16 %v931, %v931
  %v996 = vpack.c.b16 %v932, %v932
  %v997 = vpack.c.b16 %v933, %v933
  %v998 = vpack.c.b16 %v934, %v934
  %v999 = vpack.c.b16 %v935, %v935
  %v1000 = vpack.c.b16 %v936, %v936
  %v1001 = vpack.c.b16 %v937, %v937
  %v1002 = vpack.c.b16 %v938, %v938
  %v1003 = vpack.c.b16 %v939, %v939
  %v1004 = vpack.c.b16 %v940, %v940
  %v1005 = vpack.c.b16 %v941, %v941
  %v1006 = vpack.c.b16 %v942, %v942
  %v1007 = vpack.c.b16 %v943, %v943
  %v1008 = vpack.c.b16 %v944, %v944
  %v1009 = vpack.c.b16 %v945, %v945
  %v1010 = vpack.c.b16 %v946, %v946
  %v1011 = vpack.c.b16 %v947, %v947
  %v1012 = vpack.c.b16 %v948, %v948
  %v1013 = vpack.c.b16 %v949, %v949
  %v1014 = vpack.c.b16 %v950, %v950
  %v1015 = vpack.c.b16 %v951, %v951
  %v1016 = vpack.c.b16 %v952, %v952
  %v1017 = vpack.c.b16 %v953, %v953
  %v1018 = vpack.c.b16 %v954, %v954
  %v1019 = vpack.c.b16 %v955, %v955
  %v1020 = vpack.c.b16 %v956, %v956
  %v1021 = vpack.c.b16 %v957, %v957
  %v1022 = vpack.c.b16 %v958, %v958
  %v1023 = vpack.c.b16 %v959, %v959
  %v1024 = vpack.c.b16 %v960, %v960
  %v1025 = vpack.c.b16 %v961, %v961
  %v1026 = vpack.c.b16 %v962, %v962
  %v1027 = vpack.c.b16 %v963, %v963
  %v1028 = vpack.c.b16 %v964, %v964
  %v1029 = vpack.c.b16 %v965, %v965
  %v1030 = vpack.c.b16 %v966, %v966
  %v1031 = vpack.c.b16 %v967, %v967
  %v1032 = vpack.c.b16 %v968, %v968
  %v1033 = vpack.c.b16 %v969, %v969
  %v1034 = vpack.c.b16 %v970, %v970
  %v1035 = vpack.c.b16 %v971, %v971
  %v1036 = vpack.c.b16 %v972, %v972
  %v1037 = vpack.c.b16 %v973, %v973
  %v1038 = vpack.c.b16 %v974, %v974
  %v1039 = vpack.c.b16 %v975, %v975
  %1104 = vst [vmem:[%s3] sm:$0xf] %v976
  %1105 = vst [vmem:[%s3 + $0x4] sm:$0xf] %v977
  %1106 = vst [vmem:[%s3 + $0x8] sm:$0xf] %v978
  %1107 = vst [vmem:[%s3 + $0xc] sm:$0xf] %v979
  %1108 = vst [vmem:[%s3 + $0x10] sm:$0xf] %v980
  %1109 = vst [vmem:[%s3 + $0x14] sm:$0xf] %v981
  %1110 = vst [vmem:[%s3 + $0x18] sm:$0xf] %v982
  %1111 = vst [vmem:[%s3 + $0x1c] sm:$0xf] %v983
  %1112 = vst [vmem:[%s3 + $0x20] sm:$0xf] %v984
  %1113 = vst [vmem:[%s3 + $0x24] sm:$0xf] %v985
  %1114 = vst [vmem:[%s3 + $0x28] sm:$0xf] %v986
  %1115 = vst [vmem:[%s3 + $0x2c] sm:$0xf] %v987
  %1116 = vst [vmem:[%s3 + $0x30] sm:$0xf] %v988
  %1117 = vst [vmem:[%s3 + $0x34] sm:$0xf] %v989
  %1118 = vst [vmem:[%s3 + $0x38] sm:$0xf] %v990
  %1119 = vst [vmem:[%s3 + $0x3c] sm:$0xf] %v991
  %1120 = vst [vmem:[%s3 + $0x40] sm:$0xf] %v992
  %1121 = vst [vmem:[%s3 + $0x44] sm:$0xf] %v993
  %1122 = vst [vmem:[%s3 + $0x48] sm:$0xf] %v994
  %1123 = vst [vmem:[%s3 + $0x4c] sm:$0xf] %v995
  %1124 = vst [vmem:[%s3 + $0x50] sm:$0xf] %v996
  %1125 = vst [vmem:[%s3 + $0x54] sm:$0xf] %v997
  %1126 = vst [vmem:[%s3 + $0x58] sm:$0xf] %v998
  %1127 = vst [vmem:[%s3 + $0x5c] sm:$0xf] %v999
  %1128 = vst [vmem:[%s3 + $0x60] sm:$0xf] %v1000
  %1129 = vst [vmem:[%s3 + $0x64] sm:$0xf] %v1001
  %1130 = vst [vmem:[%s3 + $0x68] sm:$0xf] %v1002
  %1131 = vst [vmem:[%s3 + $0x6c] sm:$0xf] %v1003
  %1132 = vst [vmem:[%s3 + $0x70] sm:$0xf] %v1004
  %1133 = vst [vmem:[%s3 + $0x74] sm:$0xf] %v1005
  %1134 = vst [vmem:[%s3 + $0x78] sm:$0xf] %v1006
  %1135 = vst [vmem:[%s3 + $0x7c] sm:$0xf] %v1007
  %1136 = vst [vmem:[%s3 + $0x80] sm:$0xf] %v1008
  %1137 = vst [vmem:[%s3 + $0x84] sm:$0xf] %v1009
  %1138 = vst [vmem:[%s3 + $0x88] sm:$0xf] %v1010
  %1139 = vst [vmem:[%s3 + $0x8c] sm:$0xf] %v1011
  %1140 = vst [vmem:[%s3 + $0x90] sm:$0xf] %v1012
  %1141 = vst [vmem:[%s3 + $0x94] sm:$0xf] %v1013
  %1142 = vst [vmem:[%s3 + $0x98] sm:$0xf] %v1014
  %1143 = vst [vmem:[%s3 + $0x9c] sm:$0xf] %v1015
  %1144 = vst [vmem:[%s3 + $0xa0] sm:$0xf] %v1016
  %1145 = vst [vmem:[%s3 + $0xa4] sm:$0xf] %v1017
  %1146 = vst [vmem:[%s3 + $0xa8] sm:$0xf] %v1018
  %1147 = vst [vmem:[%s3 + $0xac] sm:$0xf] %v1019
  %1148 = vst [vmem:[%s3 + $0xb0] sm:$0xf] %v1020
  %1149 = vst [vmem:[%s3 + $0xb4] sm:$0xf] %v1021
  %1150 = vst [vmem:[%s3 + $0xb8] sm:$0xf] %v1022
  %1151 = vst [vmem:[%s3 + $0xbc] sm:$0xf] %v1023
  %1152 = vst [vmem:[%s3 + $0xc0] sm:$0xf] %v1024
  %1153 = vst [vmem:[%s3 + $0xc4] sm:$0xf] %v1025
  %1154 = vst [vmem:[%s3 + $0xc8] sm:$0xf] %v1026
  %1155 = vst [vmem:[%s3 + $0xcc] sm:$0xf] %v1027
  %1156 = vst [vmem:[%s3 + $0xd0] sm:$0xf] %v1028
  %1157 = vst [vmem:[%s3 + $0xd4] sm:$0xf] %v1029
  %1158 = vst [vmem:[%s3 + $0xd8] sm:$0xf] %v1030
  %1159 = vst [vmem:[%s3 + $0xdc] sm:$0xf] %v1031
  %1160 = vst [vmem:[%s3 + $0xe0] sm:$0xf] %v1032
  %1161 = vst [vmem:[%s3 + $0xe4] sm:$0xf] %v1033
  %1162 = vst [vmem:[%s3 + $0xe8] sm:$0xf] %v1034
  %1163 = vst [vmem:[%s3 + $0xec] sm:$0xf] %v1035
  %1164 = vst [vmem:[%s3 + $0xf0] sm:$0xf] %v1036
  %1165 = vst [vmem:[%s3 + $0xf4] sm:$0xf] %v1037
  %1166 = vst [vmem:[%s3 + $0xf8] sm:$0xf] %v1038
  %1167 = vst [vmem:[%s3 + $0xfc] sm:$0xf] %v1039
  // Predicated region
  $region14: #{quantized_conv2d.1} parent=0 // pred_check
    _
  $region15: #{quantized_conv2d.1} parent=0 // pred_check_branch
    %1169 = sbr.rel (0) target = $region17
  $region16: #{quantized_conv2d.1} parent=0 // pred_region
    _
  $region17: #{quantized_conv2d.1} parent=0 // pred_fallthru
    _
  // Predicated region
  $region18: #{quantized_conv2d.1} parent=0 // pred_check
    _
  $region19: #{quantized_conv2d.1} parent=0 // pred_check_branch
    %1171 = sbr.rel (0) target = $region21
  $region20: #{quantized_conv2d.1} parent=0 // pred_region
    _
  $region21: #{quantized_conv2d.1} parent=0 // pred_fallthru
    _

</llo_original>
